<compile_context>
chip_gen: v5e
topology: v5e:2x2
jax: 0.10.0
libtpu: 0.0.40
codegen_flags: <defaults>
</compile_context>

<pallas_src>
import functools

import jax
import jax.numpy as jnp
from jax import lax
from jax.experimental import pallas as pl
from jax.experimental.pallas import tpu as pltpu

KERNEL_SIZE = 11                 # nn.MaxPool2d(kernel_size=11, stride=0)
DEFAULT_BLOCK_BYTES = 4 << 20    # ~4 MiB per input block (x2 double buffering)


def _round_up(v, m):
    return ((v + m - 1) // m) * m


def _choose_tiling(rows, nc, oh, ow, per_row_bytes, target_bytes):
    """Pick (tile_rows, group).

    tile_rows = window-rows per grid step (~target_bytes of VMEM including
    sublane/lane padding).  group = oh when output rows can be regrouped
    per-channel so the store is lane-dense (group*ow lanes), else 1.
    No divisor search / padding: the caller uses cdiv + overhanging last block.
    """
    if rows * per_row_bytes <= target_bytes:
        return rows, oh                              # whole problem in one block
    budget_rows = max(8, target_bytes // per_row_bytes)
    if ow < 128 and 8 * oh <= budget_rows:
        m = max(8, ((budget_rows // oh) // 8) * 8)   # channels per block (mult of 8)
        return m * oh, oh
    return max(8, (budget_rows // 8) * 8), 1         # plain row tiling


def _fused_maxpool_kernel(x_ref, o_ref, *, k, ow, group):
    # x_ref: (TILE_R, K, W) -- K window-rows on the sublane axis.
    # o_ref: (TILE_R // group, group*OW) -- lane-dense output block.
    # Row max: K-1 maximums over sublane slices (vld + VPU; avoids XLU reduce).
    m = x_ref[:, 0, :]
    for j in range(1, k):
        m = jnp.maximum(m, x_ref[:, j, :])
    tr = m.shape[0]
    # Column-group max on the K-times-reduced data (small in-VMEM relayout).
    cols = m[:, : ow * k].reshape(tr, ow, k)
    pooled = jnp.max(cols, axis=-1)                  # (TILE_R, OW)
    o_ref[...] = pooled.reshape(tr // group, group * ow)


def mil_precision_score_mapping(x, score, precision, mil_prob, *,
                                kernel_size=KERNEL_SIZE,
                                target_block_bytes=DEFAULT_BLOCK_BYTES):
    """Pallas equivalent of MIL_Precision_Score_Mapping.forward (11x11 max pool)."""
    del score, precision, mil_prob          # unused by the PyTorch forward
    n, c, h, w = x.shape
    k = kernel_size
    oh, ow = h // k, w // k
    assert oh >= 1 and ow >= 1, "spatial dims must be >= kernel_size"

    if h % k:
        # TODO(synk): fold this crop into the index_map to also avoid the one-off
        # copy when h is not a multiple of kernel_size (the w tail is already
        # handled in-kernel without any copy).
        x = x[:, :, : oh * k, :]

    nc = n * c
    rows = nc * oh
    xr = x.reshape(rows, k, w)              # pure reshape, no data movement

    itemsize = jnp.dtype(x.dtype).itemsize
    sublane = {4: 8, 2: 16, 1: 32}.get(itemsize, 8)      # dtype-aware sublane packing
    per_row_bytes = _round_up(k, sublane) * _round_up(w, 128) * itemsize
    tile_rows, group = _choose_tiling(rows, nc, oh, ow, per_row_bytes,
                                      target_block_bytes)

    kernel = functools.partial(_fused_maxpool_kernel, k=k, ow=ow, group=group)
    out = pl.pallas_call(
        kernel,
        out_shape=jax.ShapeDtypeStruct((rows // group, group * ow), x.dtype),
        grid=(pl.cdiv(rows, tile_rows),),
        in_specs=[pl.BlockSpec((tile_rows, k, w), lambda i: (i, 0, 0))],
        out_specs=pl.BlockSpec((tile_rows // group, group * ow), lambda i: (i, 0)),
        compiler_params=pltpu.CompilerParams(dimension_semantics=("parallel",)),
        cost_estimate=pl.CostEstimate(
            flops=rows * (k - 1) * w + rows * ow * (k - 1),
            transcendentals=0,
            bytes_accessed=(rows * k * w + rows * ow) * itemsize),
    )(xr)
    return out.reshape(n, c, oh, ow)


def _reference_maxpool(x, kernel_size=KERNEL_SIZE):
    # Pure-JAX reference (same semantics as nn.MaxPool2d(k, stride=k), floor mode).
    n, c, h, w = x.shape
    oh, ow = h // kernel_size, w // kernel_size
    xc = x[:, :, : oh * kernel_size, : ow * kernel_size]
    return lax.reduce_window(
        xc, -jnp.inf, lax.max,
        window_dimensions=(1, 1, kernel_size, kernel_size),
        window_strides=(1, 1, kernel_size, kernel_size),
        padding="VALID")


if __name__ == "__main__":
    key = jax.random.PRNGKey(0)
    key, ks, kp, km = jax.random.split(key, 4)
    score = jax.random.normal(ks, (2, 4), dtype=jnp.float32)        # unused
    precision = jax.random.normal(kp, (2, 4), dtype=jnp.float32)    # unused
    mil_prob = jax.random.normal(km, (2, 4), dtype=jnp.float32)     # unused

    # (shape, target_block_bytes): exercise single-block lane-dense path, the
    # multi-block grouped path with an overhanging last tile, and the plain
    # row-tiled path (also with overhang + unused w tail).
    tests = [
        ((2, 4, 22, 22), None),
        ((3, 5, 33, 35), 200 * 1024),
        ((3, 5, 33, 35), 64 * 1024),
    ]
    for shape, tgt in tests:
        key, kx = jax.random.split(key)
        x = jax.random.normal(kx, shape, dtype=jnp.float32)
        kwargs = {} if tgt is None else {"target_block_bytes": tgt}
        out = mil_precision_score_mapping(x, score, precision, mil_prob, **kwargs)
        out = jax.block_until_ready(out)
        ref = _reference_maxpool(x)
        assert out.shape == ref.shape, (shape, out.shape, ref.shape)
        assert jnp.allclose(out, ref, atol=1e-6, rtol=1e-6), f"mismatch for {shape}"

    print("KERNEL_OK")
</pallas_src>

<mosaic_0001>
module attributes {stable_mosaic.version = 11 : i64} {
  func.func @_fused_maxpool_kernel(%arg0: i32, %arg1: memref<16x11x22xf32, #tpu.memory_space<vmem>>, %arg2: memref<8x4xf32, #tpu.memory_space<vmem>>) attributes {dimension_semantics = [#tpu.dimension_semantics<parallel>], iteration_bounds = array<i64: 1>, scalar_prefetch = 0 : i64, scratch_operands = 0 : i64, tpu.core_type = #tpu.core_type<tc>, window_params = [{transform_indices = @transform_0, window_bounds = array<i64: 16, 11, 22>}, {transform_indices = @transform_1, window_bounds = array<i64: 8, 4>}]} {
    %c0 = arith.constant 0 : index
    %c0_0 = arith.constant 0 : index
    %c0_1 = arith.constant 0 : index
    %0 = vector.load %arg1[%c0, %c0_0, %c0_1] : memref<16x11x22xf32, #tpu.memory_space<vmem>>, vector<16x1x22xf32>
    %1 = vector.shape_cast %0 : vector<16x1x22xf32> to vector<16x22xf32>
    %c0_2 = arith.constant 0 : index
    %c1 = arith.constant 1 : index
    %c0_3 = arith.constant 0 : index
    %2 = vector.load %arg1[%c0_2, %c1, %c0_3] : memref<16x11x22xf32, #tpu.memory_space<vmem>>, vector<16x1x22xf32>
    %3 = vector.shape_cast %2 : vector<16x1x22xf32> to vector<16x22xf32>
    %4 = arith.maximumf %1, %3 : vector<16x22xf32>
    %c0_4 = arith.constant 0 : index
    %c2 = arith.constant 2 : index
    %c0_5 = arith.constant 0 : index
    %5 = vector.load %arg1[%c0_4, %c2, %c0_5] : memref<16x11x22xf32, #tpu.memory_space<vmem>>, vector<16x1x22xf32>
    %6 = vector.shape_cast %5 : vector<16x1x22xf32> to vector<16x22xf32>
    %7 = arith.maximumf %4, %6 : vector<16x22xf32>
    %c0_6 = arith.constant 0 : index
    %c3 = arith.constant 3 : index
    %c0_7 = arith.constant 0 : index
    %8 = vector.load %arg1[%c0_6, %c3, %c0_7] : memref<16x11x22xf32, #tpu.memory_space<vmem>>, vector<16x1x22xf32>
    %9 = vector.shape_cast %8 : vector<16x1x22xf32> to vector<16x22xf32>
    %10 = arith.maximumf %7, %9 : vector<16x22xf32>
    %c0_8 = arith.constant 0 : index
    %c4 = arith.constant 4 : index
    %c0_9 = arith.constant 0 : index
    %11 = vector.load %arg1[%c0_8, %c4, %c0_9] : memref<16x11x22xf32, #tpu.memory_space<vmem>>, vector<16x1x22xf32>
    %12 = vector.shape_cast %11 : vector<16x1x22xf32> to vector<16x22xf32>
    %13 = arith.maximumf %10, %12 : vector<16x22xf32>
    %c0_10 = arith.constant 0 : index
    %c5 = arith.constant 5 : index
    %c0_11 = arith.constant 0 : index
    %14 = vector.load %arg1[%c0_10, %c5, %c0_11] : memref<16x11x22xf32, #tpu.memory_space<vmem>>, vector<16x1x22xf32>
    %15 = vector.shape_cast %14 : vector<16x1x22xf32> to vector<16x22xf32>
    %16 = arith.maximumf %13, %15 : vector<16x22xf32>
    %c0_12 = arith.constant 0 : index
    %c6 = arith.constant 6 : index
    %c0_13 = arith.constant 0 : index
    %17 = vector.load %arg1[%c0_12, %c6, %c0_13] : memref<16x11x22xf32, #tpu.memory_space<vmem>>, vector<16x1x22xf32>
    %18 = vector.shape_cast %17 : vector<16x1x22xf32> to vector<16x22xf32>
    %19 = arith.maximumf %16, %18 : vector<16x22xf32>
    %c0_14 = arith.constant 0 : index
    %c7 = arith.constant 7 : index
    %c0_15 = arith.constant 0 : index
    %20 = vector.load %arg1[%c0_14, %c7, %c0_15] : memref<16x11x22xf32, #tpu.memory_space<vmem>>, vector<16x1x22xf32>
    %21 = vector.shape_cast %20 : vector<16x1x22xf32> to vector<16x22xf32>
    %22 = arith.maximumf %19, %21 : vector<16x22xf32>
    %c0_16 = arith.constant 0 : index
    %c8 = arith.constant 8 : index
    %c0_17 = arith.constant 0 : index
    %23 = vector.load %arg1[%c0_16, %c8, %c0_17] : memref<16x11x22xf32, #tpu.memory_space<vmem>>, vector<16x1x22xf32>
    %24 = vector.shape_cast %23 : vector<16x1x22xf32> to vector<16x22xf32>
    %25 = arith.maximumf %22, %24 : vector<16x22xf32>
    %c0_18 = arith.constant 0 : index
    %c9 = arith.constant 9 : index
    %c0_19 = arith.constant 0 : index
    %26 = vector.load %arg1[%c0_18, %c9, %c0_19] : memref<16x11x22xf32, #tpu.memory_space<vmem>>, vector<16x1x22xf32>
    %27 = vector.shape_cast %26 : vector<16x1x22xf32> to vector<16x22xf32>
    %28 = arith.maximumf %25, %27 : vector<16x22xf32>
    %c0_20 = arith.constant 0 : index
    %c10 = arith.constant 10 : index
    %c0_21 = arith.constant 0 : index
    %29 = vector.load %arg1[%c0_20, %c10, %c0_21] : memref<16x11x22xf32, #tpu.memory_space<vmem>>, vector<16x1x22xf32>
    %30 = vector.shape_cast %29 : vector<16x1x22xf32> to vector<16x22xf32>
    %31 = arith.maximumf %28, %30 : vector<16x22xf32>
    %32 = vector.shape_cast %31 : vector<16x22xf32> to vector<16x2x11xf32>
    %cst = arith.constant dense<0xFF800000> : vector<16x2xf32>
    %33 = vector.multi_reduction <maximumf>, %32, %cst [2] : vector<16x2x11xf32> to vector<16x2xf32>
    %34 = vector.shape_cast %33 : vector<16x2xf32> to vector<8x4xf32>
    %c0_22 = arith.constant 0 : index
    %c0_23 = arith.constant 0 : index
    %35 = vector.load %arg2[%c0_22, %c0_23] : memref<8x4xf32, #tpu.memory_space<vmem>>, vector<8x4xf32>
    tpu.vector_store %arg2[%c0_22, %c0_23], %34 {strides = array<i32>} : memref<8x4xf32, #tpu.memory_space<vmem>>, vector<8x4xf32>,
    return
  }
  func.func @transform_0(%arg0: i32) -> (i32, i32, i32) {
    %c0_i32 = arith.constant 0 : i32
    %c0_i32_0 = arith.constant 0 : i32
    %c0_i32_1 = arith.constant 0 : i32
    return %arg0, %c0_i32, %c0_i32_0 : i32, i32, i32
  }
  func.func @transform_1(%arg0: i32) -> (i32, i32) {
    %c0_i32 = arith.constant 0 : i32
    %c0_i32_0 = arith.constant 0 : i32
    return %arg0, %c0_i32 : i32, i32
  }
}

</mosaic_0001>

<llo_original>
// kernel: tpu_custom_call.1
$region0: #{tpu_custom_call.1}
  #allocation0 [shape = 'u32[]', space=smem, size = 0x4, offset = 0x4, fixed_abs, tag = 'smem constant byte address 0x4 - core index']
  #allocation1 [shape = 'u32[72,128]{1,0:T(1,128)}', space=vmem, size = 0x9000, scoped, tag = 'internal scratch']
  %s0 = inlined_call_operand.vmem [shape: f32[16,11,22], index: 0, kind: input, shape index: {}]
  %s1 = inlined_call_operand.vmem [shape: f32[8,4], index: 1, kind: output, shape index: {}]
  %s2 = sld [smem:[#allocation0]]
  $region14: #{tpu_custom_call.1} parent=0
    _
  %s4 = ssub.s32 1, %s2
  %s5 = scalar_select 0, %s4, %s2
  // Predicated region
  $region2: #{tpu_custom_call.1} parent=0 // pred_check
    _
  $region3: #{tpu_custom_call.1} parent=0 // pred_check_branch
    %7 = sbr.rel (0) target = $region5
  $region4: #{tpu_custom_call.1} parent=0 // pred_region
    _
  $region5: #{tpu_custom_call.1} parent=0 // pred_fallthru
    _
  %v8 = vld [vmem:[%s0] sm:$0x1]
  %v9 = vld [vmem:[%s0 + $0x10] sm:$0x1]
  %v10 = vld [vmem:[%s0 + $0x20] sm:$0x1]
  %v11 = vld [vmem:[%s0 + $0x30] sm:$0x1]
  %v12 = vld [vmem:[%s0 + $0x40] sm:$0x1]
  %v13 = vld [vmem:[%s0 + $0x50] sm:$0x1]
  %v14 = vld [vmem:[%s0 + $0x60] sm:$0x1]
  %v15 = vld [vmem:[%s0 + $0x70] sm:$0x1]
  %v16 = vld [vmem:[%s0 + $0x80] sm:$0x1]
  %v17 = vld [vmem:[%s0 + $0x90] sm:$0x1]
  %v18 = vld [vmem:[%s0 + $0xa0] sm:$0x1]
  %v19 = vld [vmem:[%s0 + $0xb0] sm:$0x1]
  %v20 = vld [vmem:[%s0 + $0xc0] sm:$0x1]
  %v21 = vld [vmem:[%s0 + $0xd0] sm:$0x1]
  %v22 = vld [vmem:[%s0 + $0xe0] sm:$0x1]
  %v23 = vld [vmem:[%s0 + $0xf0] sm:$0x1]
  %v24 = vld [vmem:[%s0 + $0x1] sm:$0x1]
  %v25 = vld [vmem:[%s0 + $0x11] sm:$0x1]
  %v26 = vld [vmem:[%s0 + $0x21] sm:$0x1]
  %v27 = vld [vmem:[%s0 + $0x31] sm:$0x1]
  %v28 = vld [vmem:[%s0 + $0x41] sm:$0x1]
  %v29 = vld [vmem:[%s0 + $0x51] sm:$0x1]
  %v30 = vld [vmem:[%s0 + $0x61] sm:$0x1]
  %v31 = vld [vmem:[%s0 + $0x71] sm:$0x1]
  %v32 = vld [vmem:[%s0 + $0x81] sm:$0x1]
  %v33 = vld [vmem:[%s0 + $0x91] sm:$0x1]
  %v34 = vld [vmem:[%s0 + $0xa1] sm:$0x1]
  %v35 = vld [vmem:[%s0 + $0xb1] sm:$0x1]
  %v36 = vld [vmem:[%s0 + $0xc1] sm:$0x1]
  %v37 = vld [vmem:[%s0 + $0xd1] sm:$0x1]
  %v38 = vld [vmem:[%s0 + $0xe1] sm:$0x1]
  %v39 = vld [vmem:[%s0 + $0xf1] sm:$0x1]
  %v40 = vmax.f32 %v8, %v24
  %v41 = vmax.f32 %v9, %v25
  %v42 = vmax.f32 %v10, %v26
  %v43 = vmax.f32 %v11, %v27
  %v44 = vmax.f32 %v12, %v28
  %v45 = vmax.f32 %v13, %v29
  %v46 = vmax.f32 %v14, %v30
  %v47 = vmax.f32 %v15, %v31
  %v48 = vmax.f32 %v16, %v32
  %v49 = vmax.f32 %v17, %v33
  %v50 = vmax.f32 %v18, %v34
  %v51 = vmax.f32 %v19, %v35
  %v52 = vmax.f32 %v20, %v36
  %v53 = vmax.f32 %v21, %v37
  %v54 = vmax.f32 %v22, %v38
  %v55 = vmax.f32 %v23, %v39
  %v56 = vld [vmem:[%s0 + $0x2] sm:$0x1]
  %v57 = vld [vmem:[%s0 + $0x12] sm:$0x1]
  %v58 = vld [vmem:[%s0 + $0x22] sm:$0x1]
  %v59 = vld [vmem:[%s0 + $0x32] sm:$0x1]
  %v60 = vld [vmem:[%s0 + $0x42] sm:$0x1]
  %v61 = vld [vmem:[%s0 + $0x52] sm:$0x1]
  %v62 = vld [vmem:[%s0 + $0x62] sm:$0x1]
  %v63 = vld [vmem:[%s0 + $0x72] sm:$0x1]
  %v64 = vld [vmem:[%s0 + $0x82] sm:$0x1]
  %v65 = vld [vmem:[%s0 + $0x92] sm:$0x1]
  %v66 = vld [vmem:[%s0 + $0xa2] sm:$0x1]
  %v67 = vld [vmem:[%s0 + $0xb2] sm:$0x1]
  %v68 = vld [vmem:[%s0 + $0xc2] sm:$0x1]
  %v69 = vld [vmem:[%s0 + $0xd2] sm:$0x1]
  %v70 = vld [vmem:[%s0 + $0xe2] sm:$0x1]
  %v71 = vld [vmem:[%s0 + $0xf2] sm:$0x1]
  %v72 = vmax.f32 %v40, %v56
  %v73 = vmax.f32 %v41, %v57
  %v74 = vmax.f32 %v42, %v58
  %v75 = vmax.f32 %v43, %v59
  %v76 = vmax.f32 %v44, %v60
  %v77 = vmax.f32 %v45, %v61
  %v78 = vmax.f32 %v46, %v62
  %v79 = vmax.f32 %v47, %v63
  %v80 = vmax.f32 %v48, %v64
  %v81 = vmax.f32 %v49, %v65
  %v82 = vmax.f32 %v50, %v66
  %v83 = vmax.f32 %v51, %v67
  %v84 = vmax.f32 %v52, %v68
  %v85 = vmax.f32 %v53, %v69
  %v86 = vmax.f32 %v54, %v70
  %v87 = vmax.f32 %v55, %v71
  %v88 = vld [vmem:[%s0 + $0x3] sm:$0x1]
  %v89 = vld [vmem:[%s0 + $0x13] sm:$0x1]
  %v90 = vld [vmem:[%s0 + $0x23] sm:$0x1]
  %v91 = vld [vmem:[%s0 + $0x33] sm:$0x1]
  %v92 = vld [vmem:[%s0 + $0x43] sm:$0x1]
  %v93 = vld [vmem:[%s0 + $0x53] sm:$0x1]
  %v94 = vld [vmem:[%s0 + $0x63] sm:$0x1]
  %v95 = vld [vmem:[%s0 + $0x73] sm:$0x1]
  %v96 = vld [vmem:[%s0 + $0x83] sm:$0x1]
  %v97 = vld [vmem:[%s0 + $0x93] sm:$0x1]
  %v98 = vld [vmem:[%s0 + $0xa3] sm:$0x1]
  %v99 = vld [vmem:[%s0 + $0xb3] sm:$0x1]
  %v100 = vld [vmem:[%s0 + $0xc3] sm:$0x1]
  %v101 = vld [vmem:[%s0 + $0xd3] sm:$0x1]
  %v102 = vld [vmem:[%s0 + $0xe3] sm:$0x1]
  %v103 = vld [vmem:[%s0 + $0xf3] sm:$0x1]
  %v104 = vmax.f32 %v72, %v88
  %v105 = vmax.f32 %v73, %v89
  %v106 = vmax.f32 %v74, %v90
  %v107 = vmax.f32 %v75, %v91
  %v108 = vmax.f32 %v76, %v92
  %v109 = vmax.f32 %v77, %v93
  %v110 = vmax.f32 %v78, %v94
  %v111 = vmax.f32 %v79, %v95
  %v112 = vmax.f32 %v80, %v96
  %v113 = vmax.f32 %v81, %v97
  %v114 = vmax.f32 %v82, %v98
  %v115 = vmax.f32 %v83, %v99
  %v116 = vmax.f32 %v84, %v100
  %v117 = vmax.f32 %v85, %v101
  %v118 = vmax.f32 %v86, %v102
  %v119 = vmax.f32 %v87, %v103
  %v120 = vld [vmem:[%s0 + $0x4] sm:$0x1]
  %v121 = vld [vmem:[%s0 + $0x14] sm:$0x1]
  %v122 = vld [vmem:[%s0 + $0x24] sm:$0x1]
  %v123 = vld [vmem:[%s0 + $0x34] sm:$0x1]
  %v124 = vld [vmem:[%s0 + $0x44] sm:$0x1]
  %v125 = vld [vmem:[%s0 + $0x54] sm:$0x1]
  %v126 = vld [vmem:[%s0 + $0x64] sm:$0x1]
  %v127 = vld [vmem:[%s0 + $0x74] sm:$0x1]
  %v128 = vld [vmem:[%s0 + $0x84] sm:$0x1]
  %v129 = vld [vmem:[%s0 + $0x94] sm:$0x1]
  %v130 = vld [vmem:[%s0 + $0xa4] sm:$0x1]
  %v131 = vld [vmem:[%s0 + $0xb4] sm:$0x1]
  %v132 = vld [vmem:[%s0 + $0xc4] sm:$0x1]
  %v133 = vld [vmem:[%s0 + $0xd4] sm:$0x1]
  %v134 = vld [vmem:[%s0 + $0xe4] sm:$0x1]
  %v135 = vld [vmem:[%s0 + $0xf4] sm:$0x1]
  %v136 = vmax.f32 %v104, %v120
  %v137 = vmax.f32 %v105, %v121
  %v138 = vmax.f32 %v106, %v122
  %v139 = vmax.f32 %v107, %v123
  %v140 = vmax.f32 %v108, %v124
  %v141 = vmax.f32 %v109, %v125
  %v142 = vmax.f32 %v110, %v126
  %v143 = vmax.f32 %v111, %v127
  %v144 = vmax.f32 %v112, %v128
  %v145 = vmax.f32 %v113, %v129
  %v146 = vmax.f32 %v114, %v130
  %v147 = vmax.f32 %v115, %v131
  %v148 = vmax.f32 %v116, %v132
  %v149 = vmax.f32 %v117, %v133
  %v150 = vmax.f32 %v118, %v134
  %v151 = vmax.f32 %v119, %v135
  %v152 = vld [vmem:[%s0 + $0x5] sm:$0x1]
  %v153 = vld [vmem:[%s0 + $0x15] sm:$0x1]
  %v154 = vld [vmem:[%s0 + $0x25] sm:$0x1]
  %v155 = vld [vmem:[%s0 + $0x35] sm:$0x1]
  %v156 = vld [vmem:[%s0 + $0x45] sm:$0x1]
  %v157 = vld [vmem:[%s0 + $0x55] sm:$0x1]
  %v158 = vld [vmem:[%s0 + $0x65] sm:$0x1]
  %v159 = vld [vmem:[%s0 + $0x75] sm:$0x1]
  %v160 = vld [vmem:[%s0 + $0x85] sm:$0x1]
  %v161 = vld [vmem:[%s0 + $0x95] sm:$0x1]
  %v162 = vld [vmem:[%s0 + $0xa5] sm:$0x1]
  %v163 = vld [vmem:[%s0 + $0xb5] sm:$0x1]
  %v164 = vld [vmem:[%s0 + $0xc5] sm:$0x1]
  %v165 = vld [vmem:[%s0 + $0xd5] sm:$0x1]
  %v166 = vld [vmem:[%s0 + $0xe5] sm:$0x1]
  %v167 = vld [vmem:[%s0 + $0xf5] sm:$0x1]
  %v168 = vmax.f32 %v136, %v152
  %v169 = vmax.f32 %v137, %v153
  %v170 = vmax.f32 %v138, %v154
  %v171 = vmax.f32 %v139, %v155
  %v172 = vmax.f32 %v140, %v156
  %v173 = vmax.f32 %v141, %v157
  %v174 = vmax.f32 %v142, %v158
  %v175 = vmax.f32 %v143, %v159
  %v176 = vmax.f32 %v144, %v160
  %v177 = vmax.f32 %v145, %v161
  %v178 = vmax.f32 %v146, %v162
  %v179 = vmax.f32 %v147, %v163
  %v180 = vmax.f32 %v148, %v164
  %v181 = vmax.f32 %v149, %v165
  %v182 = vmax.f32 %v150, %v166
  %v183 = vmax.f32 %v151, %v167
  %v184 = vld [vmem:[%s0 + $0x6] sm:$0x1]
  %v185 = vld [vmem:[%s0 + $0x16] sm:$0x1]
  %v186 = vld [vmem:[%s0 + $0x26] sm:$0x1]
  %v187 = vld [vmem:[%s0 + $0x36] sm:$0x1]
  %v188 = vld [vmem:[%s0 + $0x46] sm:$0x1]
  %v189 = vld [vmem:[%s0 + $0x56] sm:$0x1]
  %v190 = vld [vmem:[%s0 + $0x66] sm:$0x1]
  %v191 = vld [vmem:[%s0 + $0x76] sm:$0x1]
  %v192 = vld [vmem:[%s0 + $0x86] sm:$0x1]
  %v193 = vld [vmem:[%s0 + $0x96] sm:$0x1]
  %v194 = vld [vmem:[%s0 + $0xa6] sm:$0x1]
  %v195 = vld [vmem:[%s0 + $0xb6] sm:$0x1]
  %v196 = vld [vmem:[%s0 + $0xc6] sm:$0x1]
  %v197 = vld [vmem:[%s0 + $0xd6] sm:$0x1]
  %v198 = vld [vmem:[%s0 + $0xe6] sm:$0x1]
  %v199 = vld [vmem:[%s0 + $0xf6] sm:$0x1]
  %v200 = vmax.f32 %v168, %v184
  %v201 = vmax.f32 %v169, %v185
  %v202 = vmax.f32 %v170, %v186
  %v203 = vmax.f32 %v171, %v187
  %v204 = vmax.f32 %v172, %v188
  %v205 = vmax.f32 %v173, %v189
  %v206 = vmax.f32 %v174, %v190
  %v207 = vmax.f32 %v175, %v191
  %v208 = vmax.f32 %v176, %v192
  %v209 = vmax.f32 %v177, %v193
  %v210 = vmax.f32 %v178, %v194
  %v211 = vmax.f32 %v179, %v195
  %v212 = vmax.f32 %v180, %v196
  %v213 = vmax.f32 %v181, %v197
  %v214 = vmax.f32 %v182, %v198
  %v215 = vmax.f32 %v183, %v199
  %v216 = vld [vmem:[%s0 + $0x7] sm:$0x1]
  %v217 = vld [vmem:[%s0 + $0x17] sm:$0x1]
  %v218 = vld [vmem:[%s0 + $0x27] sm:$0x1]
  %v219 = vld [vmem:[%s0 + $0x37] sm:$0x1]
  %v220 = vld [vmem:[%s0 + $0x47] sm:$0x1]
  %v221 = vld [vmem:[%s0 + $0x57] sm:$0x1]
  %v222 = vld [vmem:[%s0 + $0x67] sm:$0x1]
  %v223 = vld [vmem:[%s0 + $0x77] sm:$0x1]
  %v224 = vld [vmem:[%s0 + $0x87] sm:$0x1]
  %v225 = vld [vmem:[%s0 + $0x97] sm:$0x1]
  %v226 = vld [vmem:[%s0 + $0xa7] sm:$0x1]
  %v227 = vld [vmem:[%s0 + $0xb7] sm:$0x1]
  %v228 = vld [vmem:[%s0 + $0xc7] sm:$0x1]
  %v229 = vld [vmem:[%s0 + $0xd7] sm:$0x1]
  %v230 = vld [vmem:[%s0 + $0xe7] sm:$0x1]
  %v231 = vld [vmem:[%s0 + $0xf7] sm:$0x1]
  %v232 = vmax.f32 %v200, %v216
  %v233 = vmax.f32 %v201, %v217
  %v234 = vmax.f32 %v202, %v218
  %v235 = vmax.f32 %v203, %v219
  %v236 = vmax.f32 %v204, %v220
  %v237 = vmax.f32 %v205, %v221
  %v238 = vmax.f32 %v206, %v222
  %v239 = vmax.f32 %v207, %v223
  %v240 = vmax.f32 %v208, %v224
  %v241 = vmax.f32 %v209, %v225
  %v242 = vmax.f32 %v210, %v226
  %v243 = vmax.f32 %v211, %v227
  %v244 = vmax.f32 %v212, %v228
  %v245 = vmax.f32 %v213, %v229
  %v246 = vmax.f32 %v214, %v230
  %v247 = vmax.f32 %v215, %v231
  %v248 = vld [vmem:[%s0 + $0x8] sm:$0x1]
  %v249 = vld [vmem:[%s0 + $0x18] sm:$0x1]
  %v250 = vld [vmem:[%s0 + $0x28] sm:$0x1]
  %v251 = vld [vmem:[%s0 + $0x38] sm:$0x1]
  %v252 = vld [vmem:[%s0 + $0x48] sm:$0x1]
  %v253 = vld [vmem:[%s0 + $0x58] sm:$0x1]
  %v254 = vld [vmem:[%s0 + $0x68] sm:$0x1]
  %v255 = vld [vmem:[%s0 + $0x78] sm:$0x1]
  %v256 = vld [vmem:[%s0 + $0x88] sm:$0x1]
  %v257 = vld [vmem:[%s0 + $0x98] sm:$0x1]
  %v258 = vld [vmem:[%s0 + $0xa8] sm:$0x1]
  %v259 = vld [vmem:[%s0 + $0xb8] sm:$0x1]
  %v260 = vld [vmem:[%s0 + $0xc8] sm:$0x1]
  %v261 = vld [vmem:[%s0 + $0xd8] sm:$0x1]
  %v262 = vld [vmem:[%s0 + $0xe8] sm:$0x1]
  %v263 = vld [vmem:[%s0 + $0xf8] sm:$0x1]
  %v264 = vmax.f32 %v232, %v248
  %v265 = vmax.f32 %v233, %v249
  %v266 = vmax.f32 %v234, %v250
  %v267 = vmax.f32 %v235, %v251
  %v268 = vmax.f32 %v236, %v252
  %v269 = vmax.f32 %v237, %v253
  %v270 = vmax.f32 %v238, %v254
  %v271 = vmax.f32 %v239, %v255
  %v272 = vmax.f32 %v240, %v256
  %v273 = vmax.f32 %v241, %v257
  %v274 = vmax.f32 %v242, %v258
  %v275 = vmax.f32 %v243, %v259
  %v276 = vmax.f32 %v244, %v260
  %v277 = vmax.f32 %v245, %v261
  %v278 = vmax.f32 %v246, %v262
  %v279 = vmax.f32 %v247, %v263
  %v280 = vld [vmem:[%s0 + $0x9] sm:$0x1]
  %v281 = vld [vmem:[%s0 + $0x19] sm:$0x1]
  %v282 = vld [vmem:[%s0 + $0x29] sm:$0x1]
  %v283 = vld [vmem:[%s0 + $0x39] sm:$0x1]
  %v284 = vld [vmem:[%s0 + $0x49] sm:$0x1]
  %v285 = vld [vmem:[%s0 + $0x59] sm:$0x1]
  %v286 = vld [vmem:[%s0 + $0x69] sm:$0x1]
  %v287 = vld [vmem:[%s0 + $0x79] sm:$0x1]
  %v288 = vld [vmem:[%s0 + $0x89] sm:$0x1]
  %v289 = vld [vmem:[%s0 + $0x99] sm:$0x1]
  %v290 = vld [vmem:[%s0 + $0xa9] sm:$0x1]
  %v291 = vld [vmem:[%s0 + $0xb9] sm:$0x1]
  %v292 = vld [vmem:[%s0 + $0xc9] sm:$0x1]
  %v293 = vld [vmem:[%s0 + $0xd9] sm:$0x1]
  %v294 = vld [vmem:[%s0 + $0xe9] sm:$0x1]
  %v295 = vld [vmem:[%s0 + $0xf9] sm:$0x1]
  %v296 = vmax.f32 %v264, %v280
  %v297 = vmax.f32 %v265, %v281
  %v298 = vmax.f32 %v266, %v282
  %v299 = vmax.f32 %v267, %v283
  %v300 = vmax.f32 %v268, %v284
  %v301 = vmax.f32 %v269, %v285
  %v302 = vmax.f32 %v270, %v286
  %v303 = vmax.f32 %v271, %v287
  %v304 = vmax.f32 %v272, %v288
  %v305 = vmax.f32 %v273, %v289
  %v306 = vmax.f32 %v274, %v290
  %v307 = vmax.f32 %v275, %v291
  %v308 = vmax.f32 %v276, %v292
  %v309 = vmax.f32 %v277, %v293
  %v310 = vmax.f32 %v278, %v294
  %v311 = vmax.f32 %v279, %v295
  %v312 = vld [vmem:[%s0 + $0xa] sm:$0x1]
  %v313 = vld [vmem:[%s0 + $0x1a] sm:$0x1]
  %v314 = vld [vmem:[%s0 + $0x2a] sm:$0x1]
  %v315 = vld [vmem:[%s0 + $0x3a] sm:$0x1]
  %v316 = vld [vmem:[%s0 + $0x4a] sm:$0x1]
  %v317 = vld [vmem:[%s0 + $0x5a] sm:$0x1]
  %v318 = vld [vmem:[%s0 + $0x6a] sm:$0x1]
  %v319 = vld [vmem:[%s0 + $0x7a] sm:$0x1]
  %v320 = vld [vmem:[%s0 + $0x8a] sm:$0x1]
  %v321 = vld [vmem:[%s0 + $0x9a] sm:$0x1]
  %v322 = vld [vmem:[%s0 + $0xaa] sm:$0x1]
  %v323 = vld [vmem:[%s0 + $0xba] sm:$0x1]
  %v324 = vld [vmem:[%s0 + $0xca] sm:$0x1]
  %v325 = vld [vmem:[%s0 + $0xda] sm:$0x1]
  %v326 = vld [vmem:[%s0 + $0xea] sm:$0x1]
  %v327 = vld [vmem:[%s0 + $0xfa] sm:$0x1]
  %v328 = vmax.f32 %v296, %v312
  %v329 = vmax.f32 %v297, %v313
  %v330 = vmax.f32 %v298, %v314
  %v331 = vmax.f32 %v299, %v315
  %v332 = vmax.f32 %v300, %v316
  %v333 = vmax.f32 %v301, %v317
  %v334 = vmax.f32 %v302, %v318
  %v335 = vmax.f32 %v303, %v319
  %v336 = vmax.f32 %v304, %v320
  %v337 = vmax.f32 %v305, %v321
  %v338 = vmax.f32 %v306, %v322
  %v339 = vmax.f32 %v307, %v323
  %v340 = vmax.f32 %v308, %v324
  %v341 = vmax.f32 %v309, %v325
  %v342 = vmax.f32 %v310, %v326
  %v343 = vmax.f32 %v311, %v327
  %360 = vrot.lane.b32.xlu0 %v328, 117
  %v361 = vpop.permute.xlu0 %360
  %362 = vrot.lane.b32.xlu0 %v329, 117
  %v363 = vpop.permute.xlu0 %362
  %364 = vrot.lane.b32.xlu0 %v330, 117
  %v365 = vpop.permute.xlu0 %364
  %366 = vrot.lane.b32.xlu0 %v331, 117
  %v367 = vpop.permute.xlu0 %366
  %368 = vrot.lane.b32.xlu0 %v332, 117
  %v369 = vpop.permute.xlu0 %368
  %370 = vrot.lane.b32.xlu0 %v333, 117
  %v371 = vpop.permute.xlu0 %370
  %372 = vrot.lane.b32.xlu0 %v334, 117
  %v373 = vpop.permute.xlu0 %372
  %374 = vrot.lane.b32.xlu0 %v335, 117
  %v375 = vpop.permute.xlu0 %374
  %376 = vrot.lane.b32.xlu0 %v336, 117
  %v377 = vpop.permute.xlu0 %376
  %378 = vrot.lane.b32.xlu0 %v337, 117
  %v379 = vpop.permute.xlu0 %378
  %380 = vrot.lane.b32.xlu0 %v338, 117
  %v381 = vpop.permute.xlu0 %380
  %382 = vrot.lane.b32.xlu0 %v339, 117
  %v383 = vpop.permute.xlu0 %382
  %384 = vrot.lane.b32.xlu0 %v340, 117
  %v385 = vpop.permute.xlu0 %384
  %386 = vrot.lane.b32.xlu0 %v341, 117
  %v387 = vpop.permute.xlu0 %386
  %388 = vrot.lane.b32.xlu0 %v342, 117
  %v389 = vpop.permute.xlu0 %388
  %390 = vrot.lane.b32.xlu0 %v343, 117
  %v391 = vpop.permute.xlu0 %390
  %v392 = vrot.slane %v329, 7
  %vm393 = vcmask 1041409
  %v394 = vsel %vm393, %v392, %v328
  %v395 = vrot.slane %v330, 6
  %vm396 = vcmask 1042434
  %v397 = vsel %vm396, %v395, %v394
  %v398 = vrot.slane %v331, 5
  %vm399 = vcmask 1043459
  %v400 = vsel %vm399, %v398, %v397
  %v401 = vrot.slane %v332, 4
  %vm402 = vcmask 1044484
  %v403 = vsel %vm402, %v401, %v400
  %v404 = vrot.slane %v333, 3
  %vm405 = vcmask 1045509
  %v406 = vsel %vm405, %v404, %v403
  %v407 = vrot.slane %v334, 2
  %vm408 = vcmask 1046534
  %v409 = vsel %vm408, %v407, %v406
  %v410 = vrot.slane %v335, 1
  %vm411 = vcmask 1047559
  %v412 = vsel %vm411, %v410, %v409
  %v413 = vrot.slane %v337, 7
  %v414 = vsel %vm393, %v413, %v336
  %v415 = vrot.slane %v338, 6
  %v416 = vsel %vm396, %v415, %v414
  %v417 = vrot.slane %v339, 5
  %v418 = vsel %vm399, %v417, %v416
  %v419 = vrot.slane %v340, 4
  %v420 = vsel %vm402, %v419, %v418
  %v421 = vrot.slane %v341, 3
  %v422 = vsel %vm405, %v421, %v420
  %v423 = vrot.slane %v342, 2
  %v424 = vsel %vm408, %v423, %v422
  %v425 = vrot.slane %v343, 1
  %v426 = vsel %vm411, %v425, %v424
  %v427 = vrot.slane %v363, 7
  %v428 = vsel %vm393, %v427, %v361
  %v429 = vrot.slane %v365, 6
  %v430 = vsel %vm396, %v429, %v428
  %v431 = vrot.slane %v367, 5
  %v432 = vsel %vm399, %v431, %v430
  %v433 = vrot.slane %v369, 4
  %v434 = vsel %vm402, %v433, %v432
  %v435 = vrot.slane %v371, 3
  %v436 = vsel %vm405, %v435, %v434
  %v437 = vrot.slane %v373, 2
  %v438 = vsel %vm408, %v437, %v436
  %v439 = vrot.slane %v375, 1
  %v440 = vsel %vm411, %v439, %v438
  %v441 = vrot.slane %v379, 7
  %v442 = vsel %vm393, %v441, %v377
  %v443 = vrot.slane %v381, 6
  %v444 = vsel %vm396, %v443, %v442
  %v445 = vrot.slane %v383, 5
  %v446 = vsel %vm399, %v445, %v444
  %v447 = vrot.slane %v385, 4
  %v448 = vsel %vm402, %v447, %v446
  %v449 = vrot.slane %v387, 3
  %v450 = vsel %vm405, %v449, %v448
  %v451 = vrot.slane %v389, 2
  %v452 = vsel %vm408, %v451, %v450
  %v453 = vrot.slane %v391, 1
  %v454 = vsel %vm411, %v453, %v452
  %v459 = vrot.slane %v412, 4
  %vm460 = vcmask 1047556
  %v461 = vsel %vm460, 0.0, %v459
  %v463 = vunpack.c.l.s4 1983009808
  %v464 = vunpack.c.0.s8 %v463
  %v465 = vperm.slane %v412, %v464
  %v467 = vunpack.c.l.s4 1983009808
  %v468 = vunpack.c.0.s8 %v467
  %v469 = vperm.slane %v461, %v468
  %v470 = vrot.slane %v440, 4
  %v471 = vsel %vm460, 0.0, %v470
  %v473 = vunpack.c.l.s4 1983009808
  %v474 = vunpack.c.0.s8 %v473
  %v475 = vperm.slane %v440, %v474
  %v477 = vunpack.c.l.s4 1983009808
  %v478 = vunpack.c.0.s8 %v477
  %v479 = vperm.slane %v471, %v478
  %v480 = vrot.slane %v475, 4
  %v481 = vsel %vm460, %v480, %v465
  %v482 = vrot.slane %v465, 4
  %v483 = vsel %vm460, %v475, %v482
  %v485 = vunpack.c.l.s4 1934713408
  %v486 = vunpack.c.0.s8 %v485
  %v487 = vperm.slane %v481, %v486
  %v489 = vunpack.c.l.s4 1934713408
  %v490 = vunpack.c.0.s8 %v489
  %v491 = vperm.slane %v483, %v490
  %v492 = vrot.slane %v479, 4
  %v493 = vsel %vm460, %v492, %v469
  %v494 = vrot.slane %v469, 4
  %v495 = vsel %vm460, %v479, %v494
  %v497 = vunpack.c.l.s4 1934713408
  %v498 = vunpack.c.0.s8 %v497
  %v499 = vperm.slane %v493, %v498
  %v501 = vunpack.c.l.s4 1934713408
  %v502 = vunpack.c.0.s8 %v501
  %v503 = vperm.slane %v495, %v502
  %v504 = vrot.slane %v487, 4
  %v505 = vsel %vm460, 0.0, %v504
  %v506 = vrot.slane %v491, 4
  %v507 = vsel %vm460, 0.0, %v506
  %v508 = vrot.slane %v499, 4
  %v509 = vsel %vm460, 0.0, %v508
  %v510 = vrot.slane %v503, 4
  %v511 = vsel %vm460, 0.0, %v510
  %v512 = vrot.slane %v426, 4
  %v513 = vsel %vm460, 0.0, %v512
  %v515 = vunpack.c.l.s4 1983009808
  %v516 = vunpack.c.0.s8 %v515
  %v517 = vperm.slane %v426, %v516
  %v519 = vunpack.c.l.s4 1983009808
  %v520 = vunpack.c.0.s8 %v519
  %v521 = vperm.slane %v513, %v520
  %v522 = vrot.slane %v454, 4
  %v523 = vsel %vm460, 0.0, %v522
  %v525 = vunpack.c.l.s4 1983009808
  %v526 = vunpack.c.0.s8 %v525
  %v527 = vperm.slane %v454, %v526
  %v529 = vunpack.c.l.s4 1983009808
  %v530 = vunpack.c.0.s8 %v529
  %v531 = vperm.slane %v523, %v530
  %v532 = vrot.slane %v527, 4
  %v533 = vsel %vm460, %v532, %v517
  %v534 = vrot.slane %v517, 4
  %v535 = vsel %vm460, %v527, %v534
  %v537 = vunpack.c.l.s4 1934713408
  %v538 = vunpack.c.0.s8 %v537
  %v539 = vperm.slane %v533, %v538
  %v541 = vunpack.c.l.s4 1934713408
  %v542 = vunpack.c.0.s8 %v541
  %v543 = vperm.slane %v535, %v542
  %v544 = vrot.slane %v531, 4
  %v545 = vsel %vm460, %v544, %v521
  %v546 = vrot.slane %v521, 4
  %v547 = vsel %vm460, %v531, %v546
  %v549 = vunpack.c.l.s4 1934713408
  %v550 = vunpack.c.0.s8 %v549
  %v551 = vperm.slane %v545, %v550
  %v553 = vunpack.c.l.s4 1934713408
  %v554 = vunpack.c.0.s8 %v553
  %v555 = vperm.slane %v547, %v554
  %v556 = vrot.slane %v539, 4
  %v557 = vsel %vm460, 0.0, %v556
  %v558 = vrot.slane %v543, 4
  %v559 = vsel %vm460, 0.0, %v558
  %v560 = vrot.slane %v551, 4
  %v561 = vsel %vm460, 0.0, %v560
  %v562 = vrot.slane %v555, 4
  %v563 = vsel %vm460, 0.0, %v562
  %vm564 = vcmask 82944
  %v565 = vsel %vm564, %v487, -inf
  %566 = vmax.xlane.f32.xlu0 %v565
  %v567 = vpop.xlane.xlu0 %566
  %v568 = vsel %vm564, %v505, -inf
  %569 = vmax.xlane.f32.xlu0 %v568
  %v570 = vpop.xlane.xlu0 %569
  %v571 = vsel %vm564, %v491, -inf
  %572 = vmax.xlane.f32.xlu0 %v571
  %v573 = vpop.xlane.xlu0 %572
  %v574 = vsel %vm564, %v507, -inf
  %575 = vmax.xlane.f32.xlu0 %v574
  %v576 = vpop.xlane.xlu0 %575
  %v577 = vsel %vm564, %v499, -inf
  %578 = vmax.xlane.f32.xlu0 %v577
  %v579 = vpop.xlane.xlu0 %578
  %v580 = vsel %vm564, %v509, -inf
  %581 = vmax.xlane.f32.xlu0 %v580
  %v582 = vpop.xlane.xlu0 %581
  %v583 = vsel %vm564, %v503, -inf
  %584 = vmax.xlane.f32.xlu0 %v583
  %v585 = vpop.xlane.xlu0 %584
  %v586 = vsel %vm564, %v511, -inf
  %587 = vmax.xlane.f32.xlu0 %v586
  %v588 = vpop.xlane.xlu0 %587
  %v589 = vsel %vm564, %v539, -inf
  %590 = vmax.xlane.f32.xlu0 %v589
  %v591 = vpop.xlane.xlu0 %590
  %v592 = vsel %vm564, %v557, -inf
  %593 = vmax.xlane.f32.xlu0 %v592
  %v594 = vpop.xlane.xlu0 %593
  %v595 = vsel %vm564, %v543, -inf
  %596 = vmax.xlane.f32.xlu0 %v595
  %v597 = vpop.xlane.xlu0 %596
  %v598 = vsel %vm564, %v559, -inf
  %599 = vmax.xlane.f32.xlu0 %v598
  %v600 = vpop.xlane.xlu0 %599
  %v601 = vsel %vm564, %v551, -inf
  %602 = vmax.xlane.f32.xlu0 %v601
  %v603 = vpop.xlane.xlu0 %602
  %v604 = vsel %vm564, %v561, -inf
  %605 = vmax.xlane.f32.xlu0 %v604
  %v606 = vpop.xlane.xlu0 %605
  %v607 = vsel %vm564, %v555, -inf
  %608 = vmax.xlane.f32.xlu0 %v607
  %v609 = vpop.xlane.xlu0 %608
  %v610 = vsel %vm564, %v563, -inf
  %611 = vmax.xlane.f32.xlu0 %v610
  %v612 = vpop.xlane.xlu0 %611
  %629 = vst [vmem:[#allocation1] ss:$4 sm:$0xff] %v567
  %s630 = scalar_lea.vmem [#allocation1], 1
  %631 = vst [vmem:[%s630] ss:$4 sm:$0xff] %v570
  %v632 = vld.sshfl [vmem:[#allocation1] sm:$0xff pattern:$0x73625140]
  %s633 = scalar_lea.vmem [#allocation1], 32
  %634 = vst [vmem:[%s633] ss:$4 sm:$0xff] %v573
  %s635 = scalar_lea.vmem [#allocation1], 33
  %636 = vst [vmem:[%s635] ss:$4 sm:$0xff] %v576
  %v637 = vld.sshfl [vmem:[#allocation1 + $0x20] sm:$0xff pattern:$0x73625140]
  %638 = vst [vmem:[#allocation1] ss:$4 sm:$0xff] %v579
  %639 = vst [vmem:[%s630] ss:$4 sm:$0xff] %v582
  %v640 = vld.sshfl [vmem:[#allocation1] sm:$0xff pattern:$0x73625140]
  %641 = vst [vmem:[%s633] ss:$4 sm:$0xff] %v585
  %642 = vst [vmem:[%s635] ss:$4 sm:$0xff] %v588
  %v643 = vld.sshfl [vmem:[#allocation1 + $0x20] sm:$0xff pattern:$0x73625140]
  %644 = vst [vmem:[#allocation1] ss:$4 sm:$0xff] %v591
  %645 = vst [vmem:[%s630] ss:$4 sm:$0xff] %v594
  %v646 = vld.sshfl [vmem:[#allocation1] sm:$0xff pattern:$0x73625140]
  %647 = vst [vmem:[%s633] ss:$4 sm:$0xff] %v597
  %648 = vst [vmem:[%s635] ss:$4 sm:$0xff] %v600
  %v649 = vld.sshfl [vmem:[#allocation1 + $0x20] sm:$0xff pattern:$0x73625140]
  %650 = vst [vmem:[#allocation1] ss:$4 sm:$0xff] %v603
  %651 = vst [vmem:[%s630] ss:$4 sm:$0xff] %v606
  %v652 = vld.sshfl [vmem:[#allocation1] sm:$0xff pattern:$0x73625140]
  %653 = vst [vmem:[%s633] ss:$4 sm:$0xff] %v609
  %654 = vst [vmem:[%s635] ss:$4 sm:$0xff] %v612
  %v655 = vld.sshfl [vmem:[#allocation1 + $0x20] sm:$0xff pattern:$0x73625140]
  %656 = vset.pattern.permute.xlu0 0
  %657 = vperm.xlu0 %656, %v632
  %v658 = vpop.permute.xlu0 %657
  %659 = vset.pattern.permute.xlu0 0
  %660 = vperm.xlu0 %659, %v637
  %v661 = vpop.permute.xlu0 %660
  %662 = vset.pattern.permute.xlu0 0
  %663 = vperm.xlu0 %662, %v640
  %v664 = vpop.permute.xlu0 %663
  %665 = vset.pattern.permute.xlu0 0
  %666 = vperm.xlu0 %665, %v643
  %v667 = vpop.permute.xlu0 %666
  %668 = vset.pattern.permute.xlu0 0
  %669 = vperm.xlu0 %668, %v646
  %v670 = vpop.permute.xlu0 %669
  %671 = vset.pattern.permute.xlu0 0
  %672 = vperm.xlu0 %671, %v649
  %v673 = vpop.permute.xlu0 %672
  %674 = vset.pattern.permute.xlu0 0
  %675 = vperm.xlu0 %674, %v652
  %v676 = vpop.permute.xlu0 %675
  %677 = vset.pattern.permute.xlu0 0
  %678 = vperm.xlu0 %677, %v655
  %v679 = vpop.permute.xlu0 %678
  %v680 = vlaneseq
  %v681 = vand.u32 %v680, 127
  %v682 = vperm.slane %v658, %v681
  %v683 = vperm.slane %v661, %v681
  %v684 = vperm.slane %v664, %v681
  %v685 = vperm.slane %v667, %v681
  %v686 = vperm.slane %v670, %v681
  %v687 = vperm.slane %v673, %v681
  %v688 = vperm.slane %v676, %v681
  %v689 = vperm.slane %v679, %v681
  %v690 = vsel %vm393, %v683, %v682
  %v691 = vsel %vm396, %v684, %v690
  %v692 = vsel %vm399, %v685, %v691
  %v693 = vsel %vm402, %v686, %v692
  %v694 = vsel %vm405, %v687, %v693
  %v695 = vsel %vm408, %v688, %v694
  %v696 = vsel %vm411, %v689, %v695
  %vm698 = vcmask 31744
  %699 = vst.msk [vmem:[%s1] sm:$0xff] %vm698, %v696
  // Predicated region
  $region6: #{tpu_custom_call.1} parent=0 // pred_check
    _
  $region7: #{tpu_custom_call.1} parent=0 // pred_check_branch
    %701 = sbr.rel (0) target = $region9
  $region8: #{tpu_custom_call.1} parent=0 // pred_region
    _
  $region9: #{tpu_custom_call.1} parent=0 // pred_fallthru
    _
  // Predicated region
  $region10: #{tpu_custom_call.1} parent=0 // pred_check
    _
  $region11: #{tpu_custom_call.1} parent=0 // pred_check_branch
    %703 = sbr.rel (0) target = $region13
  $region12: #{tpu_custom_call.1} parent=0 // pred_region
    _
  $region13: #{tpu_custom_call.1} parent=0 // pred_fallthru
    _

</llo_original>
